<compile_context>
chip_gen: v7x
topology: tpu7x:2x2x1
jax: 0.10.0
libtpu: 0.0.40
codegen_flags: <defaults>
</compile_context>

<pallas_src>
import math
from collections import OrderedDict

import numpy as np
import jax
import jax.numpy as jnp
from jax import lax
from jax.experimental import pallas as pl
from jax.experimental.pallas import tpu as pltpu

B_PREFIX = "B"
I_PREFIX = "I"
O_PREFIX = "O"


def _round_up(x, m):
    return ((x + m - 1) // m) * m


# ----------------------------------------------------------------------------
# Pure-python helpers (faithful re-implementations of the PyTorch module glue)
# ----------------------------------------------------------------------------
def label_map(num_tags):
    n_pos = num_tags - 1
    span_to_seq = OrderedDict()
    seq_to_span = OrderedDict()
    for i in range(num_tags):
        if i == 0:
            span_to_seq[i] = (0, 0)
            seq_to_span[0] = (O_PREFIX, 0)
        else:
            B = i
            I = i + n_pos
            span_to_seq[i] = (B, I)
            seq_to_span[B] = (B_PREFIX, B)
            seq_to_span[I] = (I_PREFIX, B)
    return span_to_seq, seq_to_span


def BIO_to_span(labels, seq_tag_map):
    spans = []
    start = end = -1
    active_tag = None
    if not any(labels):
        return []
    for i, lab in enumerate(labels):
        prefix, tag = seq_tag_map[lab]
        if prefix == O_PREFIX:
            if active_tag is not None:
                spans.append((active_tag, start, end))
            active_tag = None
        elif prefix == B_PREFIX:
            if active_tag is not None:
                spans.append((active_tag, start, end))
            active_tag = tag
            start = i
            end = i + 1
        elif prefix == I_PREFIX and tag == active_tag:
            end += 1
        else:  # I with mismatched tag
            if active_tag is not None:
                spans.append((active_tag, start, end))
            active_tag = None
    if active_tag is not None:
        spans.append((active_tag, start, end))
    return spans


def seq_tags_to_spans(seq_tags, span_map, seq_tag_map):
    # TODO(synk): dict-based span lookup stays on host (no Pallas equivalent).
    batch_size = len(seq_tags)
    num_spans = len(span_map)
    span_labels = np.zeros((batch_size, num_spans), dtype=np.int64)
    for i_seq, seq in enumerate(seq_tags):
        for lab, s, e in BIO_to_span(seq, seq_tag_map):
            idx = (s, e)
            if idx in span_map:
                span_labels[i_seq, span_map[idx]] = lab
    return span_labels


# ----------------------------------------------------------------------------
# Pallas kernel 1: fused, tiled Linear projection
#   (B*S, D) @ (D, T_pad) + bias  with bf16 inputs, f32 MXU accumulation.
#   All heads' weights are concatenated into one lane-dense (multiple-of-128)
#   output so seq_tensor is read from HBM once for every scorer.
# ----------------------------------------------------------------------------
def _projection_kernel(x_ref, w_ref, b_ref, o_ref):
    o_ref[...] = (
        jnp.dot(x_ref[...], w_ref[...], preferred_element_type=jnp.float32)
        + b_ref[...]
    )


def fused_projection_pallas(seq_tensor, W_fused_bf16, b_fused_f32):
    Bsz, S, D = seq_tensor.shape
    T_pad = W_fused_bf16.shape[1]
    M = Bsz * S

    # Tile M for double-buffered HBM->VMEM pipelining; 512 rows is a good
    # default on all chips, shrink for tiny inputs (keep a multiple of 16 for
    # bf16 sublane packing).
    TILE_M = min(512, _round_up(M, 16))
    M_pad = _round_up(M, TILE_M)

    x2 = seq_tensor.reshape(M, D)
    if M_pad > M:
        x2 = jnp.pad(x2, ((0, M_pad - M), (0, 0)))
    x2 = x2.astype(jnp.bfloat16)

    # Explicit VMEM budget (re-derived per tile) so the same code fits v7x's
    # 64 MiB VMEM with headroom while staying above what double-buffering needs.
    tile_bytes = TILE_M * D * 2 + D * T_pad * 2 + T_pad * 4 + TILE_M * T_pad * 4
    vmem_limit = int(min(48 * 1024 * 1024, max(8 * 1024 * 1024, 6 * tile_bytes)))

    out = pl.pallas_call(
        _projection_kernel,
        grid=(M_pad // TILE_M,),
        in_specs=[
            pl.BlockSpec((TILE_M, D), lambda i: (i, 0)),
            pl.BlockSpec((D, T_pad), lambda i: (0, 0)),
            pl.BlockSpec((1, T_pad), lambda i: (0, 0)),
        ],
        out_specs=pl.BlockSpec((TILE_M, T_pad), lambda i: (i, 0)),
        out_shape=jax.ShapeDtypeStruct((M_pad, T_pad), jnp.float32),
        compiler_params=pltpu.CompilerParams(
            dimension_semantics=("parallel",),
            vmem_limit_bytes=vmem_limit,
        ),
    )(x2, W_fused_bf16, b_fused_f32)
    return out[:M]  # (M, T_pad) float32


def build_fused_head_params(scorers):
    Ws, bs, offsets = [], [], []
    off = 0
    for sc in scorers:
        offsets.append(off)
        Ws.append(sc.W)
        bs.append(sc.b)
        off += sc.num_tags_seq
    D = Ws[0].shape[0]
    T_total = off
    T_pad = max(128, _round_up(T_total, 128))
    Wf = jnp.zeros((D, T_pad), jnp.float32).at[:, :T_total].set(
        jnp.concatenate(Ws, axis=1))
    bf = jnp.zeros((1, T_pad), jnp.float32).at[:, :T_total].set(
        jnp.concatenate(bs, axis=1))
    return Wf.astype(jnp.bfloat16), bf, offsets


# ----------------------------------------------------------------------------
# Pallas kernel 2: CRF Viterbi decode (forward DP + in-kernel backtracking)
#   Layout: tags on sublanes, batch on lanes -> alpha is (T, BB).
#   Inputs per grid step (one batch block BB):
#     emissions  (S, T, BB) f32      transitions^T (T, T) f32
#     start/end  (T, 1) f32          lengths (1, BB) int32
#   Output: decoded tags (S, BB) int32 (padded positions = 0 / "O" tag).
# ----------------------------------------------------------------------------
def _viterbi_kernel(maxlen_ref, emit_ref, transT_ref, start_ref, end_ref,
                    lens_ref, tags_ref, alpha_scr, bp_scr):
    S, T, BB = emit_ref.shape
    maxL = maxlen_ref[pl.program_id(0)]          # max length in this batch block
    lens = lens_ref[...]                         # (1, BB) int32

    # t = 0: alpha = start_transitions + emissions[0]
    alpha_scr[...] = start_ref[...] + emit_ref[0]          # (T, BB)
    bp_scr[0] = jnp.zeros((T, BB), jnp.int32)
    tags_ref[...] = jnp.zeros((S, BB), jnp.int32)

    # ---- forward DP, bounded by the true max length of the block ----
    def fwd(t, carry):
        alpha = alpha_scr[...]                              # (T, BB)
        # best[j, b] = max_i alpha[i, b] + trans[i, j]  (unrolled over tiny T;
        # every op is a full (T, BB) vreg op, batch fills the lane dim)
        best = transT_ref[:, 0:1] + alpha[0:1, :]           # (T, 1)+(1, BB)
        bp = jnp.zeros((T, BB), jnp.int32)
        for i in range(1, T):
            cand = transT_ref[:, i:i + 1] + alpha[i:i + 1, :]
            take = cand > best
            best = jnp.where(take, cand, best)
            bp = jnp.where(take, jnp.int32(i), bp)
        bp_scr[t] = bp
        active = t < lens                                   # (1, BB)
        alpha_scr[...] = jnp.where(active, best + emit_ref[t], alpha)
        return carry

    lax.fori_loop(1, maxL, fwd, 0)

    # ---- in-kernel backtracking ----
    final = alpha_scr[...] + end_ref[...]                   # (T, BB)
    sub_iota = lax.broadcasted_iota(jnp.int32, (T, BB), 0)
    m = jnp.max(final, axis=0, keepdims=True)               # (1, BB)
    init_idx = jnp.min(jnp.where(final == m, sub_iota, T),
                       axis=0, keepdims=True).astype(jnp.int32)   # argmax (first)
    last_pos = lens - 1                                     # (1, BB)

    def bwd(k, cur):
        t = maxL - 1 - k
        cur = jnp.where(last_pos == t, init_idx, cur)       # reset at position L-1
        valid = t < lens                                    # position is real
        tags_ref[pl.ds(t, 1), :] = jnp.where(valid, cur, 0)
        bp_t = bp_scr[t]                                    # (T, BB)
        prev = jnp.sum(jnp.where(sub_iota == cur, bp_t, 0),
                       axis=0, keepdims=True)               # bp[t][cur] per lane
        step_ok = jnp.logical_and(valid, t >= 1)
        return jnp.where(step_ok, prev, cur)

    lax.fori_loop(0, maxL, bwd, init_idx)


def viterbi_decode_pallas(emissions, lengths, transitions, start_t, end_t):
    """emissions (B, S, T) f32, lengths (B,) int32 -> decoded tags (B, S) int32."""
    Bsz, S, T = emissions.shape
    if Bsz <= 128:
        B_pad = _round_up(Bsz, 8)
    else:
        B_pad = _round_up(Bsz, 128)
    BB = min(B_pad, 128)
    nb = B_pad // BB

    emit_t = jnp.transpose(emissions, (1, 2, 0))            # (S, T, B)
    lens = lengths.astype(jnp.int32)
    if B_pad > Bsz:
        emit_t = jnp.pad(emit_t, ((0, 0), (0, 0), (0, B_pad - Bsz)))
        lens = jnp.pad(lens, (0, B_pad - Bsz))
    lens2 = lens.reshape(1, B_pad)
    block_max = jnp.max(lens.reshape(nb, BB), axis=1).astype(jnp.int32)  # (nb,)
    transT = jnp.transpose(transitions)                     # (T_next, T_prev)
    start_col = start_t.reshape(T, 1)
    end_col = end_t.reshape(T, 1)

    grid_spec = pltpu.PrefetchScalarGridSpec(
        num_scalar_prefetch=1,
        grid=(nb,),
        in_specs=[
            pl.BlockSpec((S, T, BB), lambda b, mx: (0, 0, b)),   # emissions
            pl.BlockSpec((T, T), lambda b, mx: (0, 0)),          # transitions^T
            pl.BlockSpec((T, 1), lambda b, mx: (0, 0)),          # start
            pl.BlockSpec((T, 1), lambda b, mx: (0, 0)),          # end
            pl.BlockSpec((1, BB), lambda b, mx: (0, b)),         # lengths
        ],
        out_specs=pl.BlockSpec((S, BB), lambda b, mx: (0, b)),   # decoded tags
        scratch_shapes=[
            pltpu.VMEM((T, BB), jnp.float32),                    # alpha
            pltpu.VMEM((S, T, BB), jnp.int32),                   # backpointers
        ],
    )
    tags_sb = pl.pallas_call(
        _viterbi_kernel,
        grid_spec=grid_spec,
        out_shape=jax.ShapeDtypeStruct((S, B_pad), jnp.int32),
        compiler_params=pltpu.CompilerParams(dimension_semantics=("parallel",)),
    )(block_max, emit_t, transT, start_col, end_col, lens2)
    return jnp.transpose(tags_sb)[:Bsz]                      # (B, S) int32


# ----------------------------------------------------------------------------
# Module equivalents
# ----------------------------------------------------------------------------
class SpanScorerCRFPallas:
    def __init__(self, key, input_dim, num_tags, name=None):
        self.input_dim = input_dim
        self.num_tags = num_tags
        self.name = name
        self.span_to_seq, self.seq_to_span = label_map(num_tags)
        self.num_tags_seq = len(self.seq_to_span)     # 2*num_tags - 1
        self.num_tags_span = len(self.span_to_seq)    # num_tags
        T = self.num_tags_seq
        k = jax.random.split(key, 5)
        bound = 1.0 / math.sqrt(input_dim)
        # nn.Linear(input_dim, num_tags_seq)
        self.W = jax.random.uniform(k[0], (input_dim, T), jnp.float32, -bound, bound)
        self.b = jax.random.uniform(k[1], (1, T), jnp.float32, -bound, bound)
        # ConditionalRandomField parameters (deterministic synthetic init)
        self.transitions = 0.1 * jax.random.normal(k[2], (T, T), jnp.float32)
        self.start_transitions = 0.1 * jax.random.normal(k[3], (1, T), jnp.float32)
        self.end_transitions = 0.1 * jax.random.normal(k[4], (1, T), jnp.float32)

    def decode(self, seq_scores, lengths, span_map):
        """seq_scores (B, S, T) -> one-hot span predictions (B, num_spans, num_tags)."""
        Bsz = seq_scores.shape[0]
        # TODO(synk): allennlp's viterbi_tags compacts non-contiguous masks via
        # index_select; here we assume left-aligned (prefix) masks.
        tags = viterbi_decode_pallas(
            seq_scores, lengths, self.transitions,
            self.start_transitions, self.end_transitions)          # (B, S) int32
        tags_np = np.asarray(tags)
        lens_np = np.asarray(lengths)
        seq_pred = [list(map(int, tags_np[b, :int(lens_np[b])])) for b in range(Bsz)]
        span_labels = seq_tags_to_spans(seq_pred, span_map, self.seq_to_span)
        return jax.nn.one_hot(jnp.asarray(span_labels),
                              num_classes=self.num_tags_span, dtype=jnp.float32)

    def forward(self, seq_tensor, seq_mask, span_map, span_indices, verbose=False):
        Bsz, S, _ = seq_tensor.shape
        Wf, bf, _ = build_fused_head_params([self])
        proj = fused_projection_pallas(seq_tensor, Wf, bf)
        seq_scores = proj[:, :self.num_tags_seq].reshape(Bsz, S, self.num_tags_seq)
        lengths = jnp.sum(seq_mask.astype(jnp.int32), axis=1)
        span_pred = self.decode(seq_scores, lengths, span_map)
        return seq_scores, span_pred


class SpanScorerCRFMultiPallas:
    def __init__(self, key, label_definition, input_dim, loss_reduction="sum"):
        self.loss_reduction = loss_reduction
        self.scorers = OrderedDict()
        keys = jax.random.split(key, len(label_definition))
        for kk, (name, label_set) in zip(keys, label_definition.items()):
            self.scorers[name] = SpanScorerCRFPallas(
                kk, input_dim=input_dim, num_tags=len(label_set), name=name)
        self.types = list(self.scorers.keys())
        # Fuse all heads' Linear layers into one lane-dense padded weight.
        self.W_fused, self.b_fused, self._offsets = build_fused_head_params(
            list(self.scorers.values()))

    def forward(self, seq_tensor, seq_mask, span_map, span_indices, verbose=False):
        Bsz, S, _ = seq_tensor.shape
        # One projection kernel serves every head (seq_tensor read from HBM once).
        proj = fused_projection_pallas(seq_tensor, self.W_fused, self.b_fused)
        lengths = jnp.sum(seq_mask.astype(jnp.int32), axis=1)

        seq_scores = OrderedDict()
        span_pred = OrderedDict()
        for (name, scorer), off in zip(self.scorers.items(), self._offsets):
            T_h = scorer.num_tags_seq
            scores_h = proj[:, off:off + T_h].reshape(Bsz, S, T_h)
            seq_scores[name] = scores_h
            span_pred[name] = scorer.decode(scores_h, lengths, span_map)
        return seq_scores, span_pred


# ----------------------------------------------------------------------------
if __name__ == "__main__":
    B, S, D = 2, 8, 32
    label_definition = OrderedDict([
        ("Trigger", ["O", "EventA", "EventB"]),                 # 3 tags
        ("Status", ["O", "present", "absent", "possible"]),     # 4 tags
    ])

    key = jax.random.PRNGKey(0)
    k_param, k_x = jax.random.split(key)
    model = SpanScorerCRFMultiPallas(k_param, label_definition, input_dim=D)

    seq_tensor = jax.random.normal(k_x, (B, S, D), dtype=jnp.float32)
    lengths = jnp.array([S, S - 2], dtype=jnp.int32)
    seq_mask = jnp.arange(S)[None, :] < lengths[:, None]        # prefix masks

    # span_map: all candidate spans of width 1..3 within the sequence
    span_map = OrderedDict()
    for s in range(S):
        for w in range(1, 4):
            e = s + w
            if e <= S:
                span_map[(s, e)] = len(span_map)
    span_indices = jnp.asarray(list(span_map.keys()), dtype=jnp.int32)

    seq_scores, span_pred = model.forward(
        seq_tensor=seq_tensor, seq_mask=seq_mask,
        span_map=span_map, span_indices=span_indices)

    for name in model.types:
        jax.block_until_ready(seq_scores[name])
        jax.block_until_ready(span_pred[name])
        assert seq_scores[name].shape == (B, S, model.scorers[name].num_tags_seq)
        assert span_pred[name].shape == (
            B, len(span_map), model.scorers[name].num_tags_span)
        assert seq_scores[name].dtype == jnp.float32
        assert span_pred[name].dtype == jnp.float32

    print("KERNEL_OK")
</pallas_src>

<mosaic_0001>
module attributes {stable_mosaic.version = 11 : i64} {
  func.func @_projection_kernel(%arg0: i32, %arg1: memref<16x32xbf16, #tpu.memory_space<vmem>>, %arg2: memref<32x128xbf16, #tpu.memory_space<vmem>>, %arg3: memref<1x128xf32, #tpu.memory_space<vmem>>, %arg4: memref<16x128xf32, #tpu.memory_space<vmem>>) attributes {dimension_semantics = [#tpu.dimension_semantics<parallel>], iteration_bounds = array<i64: 1>, scalar_prefetch = 0 : i64, scratch_operands = 0 : i64, tpu.core_type = #tpu.core_type<tc>, window_params = [{transform_indices = @transform_0, window_bounds = array<i64: 16, 32>}, {pipeline_mode = #tpu.pipeline_mode<synchronous>, transform_indices = @transform_1, window_bounds = array<i64: 32, 128>}, {pipeline_mode = #tpu.pipeline_mode<synchronous>, transform_indices = @transform_2, window_bounds = array<i64: 1, 128>}, {transform_indices = @transform_3, window_bounds = array<i64: 16, 128>}]} {
    %c0 = arith.constant 0 : index
    %c0_0 = arith.constant 0 : index
    %0 = vector.load %arg1[%c0, %c0_0] : memref<16x32xbf16, #tpu.memory_space<vmem>>, vector<16x32xbf16>
    %c0_1 = arith.constant 0 : index
    %c0_2 = arith.constant 0 : index
    %1 = vector.load %arg2[%c0_1, %c0_2] : memref<32x128xbf16, #tpu.memory_space<vmem>>, vector<32x128xbf16>
    %cst = arith.constant dense<0.000000e+00> : vector<16x128xf32>
    %2 = tpu.matmul %0, %1, %cst {dimension_numbers = #tpu.dot_dimension_numbers<[1], [0], [0], [1], [0, 0, 1, 1], [], []>} : vector<16x32xbf16>, vector<32x128xbf16>, vector<16x128xf32> -> vector<16x128xf32>
    %c0_3 = arith.constant 0 : index
    %c0_4 = arith.constant 0 : index
    %3 = vector.load %arg3[%c0_3, %c0_4] : memref<1x128xf32, #tpu.memory_space<vmem>>, vector<1x128xf32>
    %4 = vector.broadcast %3 : vector<1x128xf32> to vector<16x128xf32>
    %5 = arith.addf %2, %4 : vector<16x128xf32>
    %c0_5 = arith.constant 0 : index
    %c0_6 = arith.constant 0 : index
    %6 = vector.load %arg4[%c0_5, %c0_6] : memref<16x128xf32, #tpu.memory_space<vmem>>, vector<16x128xf32>
    tpu.vector_store %arg4[%c0_5, %c0_6], %5 {strides = array<i32>} : memref<16x128xf32, #tpu.memory_space<vmem>>, vector<16x128xf32>,
    return
  }
  func.func @transform_0(%arg0: i32) -> (i32, i32) {
    %c0_i32 = arith.constant 0 : i32
    %c0_i32_0 = arith.constant 0 : i32
    return %arg0, %c0_i32 : i32, i32
  }
  func.func @transform_1(%arg0: i32) -> (i32, i32) {
    %c0_i32 = arith.constant 0 : i32
    %c0_i32_0 = arith.constant 0 : i32
    %c0_i32_1 = arith.constant 0 : i32
    return %c0_i32, %c0_i32_0 : i32, i32
  }
  func.func @transform_2(%arg0: i32) -> (i32, i32) {
    %c0_i32 = arith.constant 0 : i32
    %c0_i32_0 = arith.constant 0 : i32
    %c0_i32_1 = arith.constant 0 : i32
    return %c0_i32, %c0_i32_0 : i32, i32
  }
  func.func @transform_3(%arg0: i32) -> (i32, i32) {
    %c0_i32 = arith.constant 0 : i32
    %c0_i32_0 = arith.constant 0 : i32
    return %arg0, %c0_i32 : i32, i32
  }
}

</mosaic_0001>

<llo_original>
// kernel: tpu_custom_call.1
$region0: #{tpu_custom_call.1}
  #allocation0 [shape = 'u32[]', space=smem, size = 0x4, offset = 0x4, fixed_abs, tag = 'smem constant byte address 0x4 - core index']
  #allocation1 [shape = 'u32[144,128]{1,0:T(1,128)}', space=vmem, size = 0x12000, scoped, tag = 'internal scratch']
  %s0 = inlined_call_operand.hbm [shape: bf16[16,32], index: 0, kind: input, shape index: {}]
  %s1 = inlined_call_operand.hbm [shape: bf16[32,128], index: 1, kind: input, shape index: {}]
  %s2 = inlined_call_operand.vmem [shape: f32[1,128], index: 2, kind: input, shape index: {}]
  %s3 = inlined_call_operand.hbm [shape: f32[16,128], index: 3, kind: output, shape index: {}]
  %s4 = sld [smem:[#allocation0]]
  $region30: #{tpu_custom_call.1} parent=0
    _
  %s6 = ssub.s32 1, %s4
  %s7 = scalar_select 0, %s6, %s4
  $region1: #{tpu_custom_call.1} parent=0
    #allocation2 [shape = 'u8[4096]{0}', space=vmem, size = 0x1000, scoped, tag = 'input window, operand 0, single buffered']
    #allocation3 [shape = 's32[1]{0}', space=sflag, size = 0x4, scoped, tag = 'scoped memory for tpu_custom_call.1']
    #allocation4 [shape = 's32[1]{0}', space=sflag, size = 0x4, scoped, tag = 'scoped memory for tpu_custom_call.1']
    #allocation5 [shape = 'u8[8192]{0}', space=vmem, size = 0x2000, scoped, tag = 'input window, operand 1, single buffered']
    #allocation6 [shape = 's32[1]{0}', space=sflag, size = 0x4, scoped, tag = 'scoped memory for tpu_custom_call.1']
    #allocation7 [shape = 'u8[8192]{0}', space=vmem, size = 0x2000, scoped, tag = 'output window, operand 0, single buffered']
    %8 = vsyncpa [#allocation3], 0
    %9 = vsyncpa [#allocation6], 0
    %10 = vsyncpa [#allocation4], 0
    // Predicated region
    $region2: #{tpu_custom_call.1} parent=1 // pred_check
      _
    $region3: #{tpu_custom_call.1} parent=1 // pred_check_branch
      %12 = sbr.rel (0) target = $region5
    $region4: #{tpu_custom_call.1} parent=1 // pred_region
      %s14 = ssub.s32 128, 128
      %15 = vsyncadd [#allocation3], %s14
      %s16 = sshll.u32 [#allocation2], 4
      %s17 = int_to_ptr.vmem [resolvable:$true] %s16
      %22 = dma.hbm_to_vmem [thread:$0]  %s0, 128, %s17, [#allocation3], 64, 64, 4
    $region5: #{tpu_custom_call.1} parent=1 // pred_fallthru
      _
    // Predicated region
    $region6: #{tpu_custom_call.1} parent=1 // pred_check
      _
    $region7: #{tpu_custom_call.1} parent=1 // pred_check_branch
      %24 = sbr.rel (0) target = $region9
    $region8: #{tpu_custom_call.1} parent=1 // pred_region
      %s26 = ssub.s32 256, 256
      %27 = vsyncadd [#allocation6], %s26
      %s28 = sshll.u32 [#allocation5], 4
      %s29 = int_to_ptr.vmem [resolvable:$true] %s28
      %34 = dma.hbm_to_vmem [thread:$0]  %s1, 256, %s29, [#allocation6], 64, 64, 4
    $region9: #{tpu_custom_call.1} parent=1 // pred_fallthru
      _
    // Predicated region
    $region10: #{tpu_custom_call.1} parent=1 // pred_check
      _
    $region11: #{tpu_custom_call.1} parent=1 // pred_check_branch
      %36 = sbr.rel (0) target = $region13
    $region12: #{tpu_custom_call.1} parent=1 // pred_region
      _
    $region13: #{tpu_custom_call.1} parent=1 // pred_fallthru
      _
    // Predicated region
    $region14: #{tpu_custom_call.1} parent=1 // pred_check
      _
    $region15: #{tpu_custom_call.1} parent=1 // pred_check_branch
      %38 = sbr.rel (0) target = $region17
    $region16: #{tpu_custom_call.1} parent=1 // pred_region
      %39 = dma.done [#allocation3], 128
    $region17: #{tpu_custom_call.1} parent=1 // pred_fallthru
      _
    // Predicated region
    $region18: #{tpu_custom_call.1} parent=1 // pred_check
      _
    $region19: #{tpu_custom_call.1} parent=1 // pred_check_branch
      %41 = sbr.rel (0) target = $region21
    $region20: #{tpu_custom_call.1} parent=1 // pred_region
      %42 = dma.done [#allocation6], 256
    $region21: #{tpu_custom_call.1} parent=1 // pred_fallthru
      _
    %v44 = vld [vmem:[#allocation2] sm:$0xf]
    %v45 = vld [vmem:[#allocation2 + $0x4] sm:$0xf]
    %v46 = vld [vmem:[#allocation5] sm:$0xf]
    %v47 = vld [vmem:[#allocation5 + $0x4] sm:$0xf]
    %v48 = vld [vmem:[#allocation5 + $0x8] sm:$0xf]
    %v49 = vld [vmem:[#allocation5 + $0xc] sm:$0xf]
    %v50 = vld [vmem:[%s2] sm:$0x1]
    %v52 = vlaneseq
    %v53 = vshrl.u32 %v52, 7
    %v54 = vsub.s32 0, %v53
    %v55 = vrot.slane %v50, %v54
    %v59 = vunpack.c.l.b16 %v44
    %v60 = vunpack.c.l.b16 %v45
    %v61 = vpack.c.b16 %v60, %v59
    %v66 = vunpack.c.l.b16 %v46
    %v67 = vunpack.c.l.b16 %v47
    %v68 = vunpack.c.l.b16 %v48
    %v69 = vunpack.c.l.b16 %v49
    %v70 = vpack.c.b16 %v67, %v66
    %v71 = vpack.c.b16 %v69, %v68
    %vm74 = vcmask 261120
    %v76 = vsel %vm74, %v61, 0
    %78 = vmatprep.subr.bf16.mxu0 0
    %79 = vmatpush1.bf16.msra.mxu0 %v70
    %80 = vmatprep.subr.bf16.mxu0 0
    %81 = vmatpush1.bf16.msra.mxu0 %v71
    %82 = vmatprep.subr.bf16.mxu0 0
    %83 = vmatpush1.bf16.msra.mxu0 0
    %84 = vmatprep.subr.bf16.mxu0 0
    %85 = vmatpush1.bf16.msra.mxu0 0
    %86 = vmatprep.subr.bf16.mxu0 0
    %87 = vmatpush1.bf16.msra.mxu0 0
    %88 = vmatprep.subr.bf16.mxu0 0
    %89 = vmatpush1.bf16.msra.mxu0 0
    %90 = vmatprep.subr.bf16.mxu0 0
    %91 = vmatpush1.bf16.msra.mxu0 0
    %92 = vmatprep.subr.bf16.mxu0 0
    %93 = vmatpush1.bf16.msra.mxu0 0
    %94 = vmatprep.subr.bf16.mxu0 0
    %95 = vmatpush1.bf16.msra.mxu0 0
    %96 = vmatprep.subr.bf16.mxu0 0
    %97 = vmatpush1.bf16.msra.mxu0 0
    %98 = vmatprep.subr.bf16.mxu0 0
    %99 = vmatpush1.bf16.msra.mxu0 0
    %100 = vmatprep.subr.bf16.mxu0 0
    %101 = vmatpush1.bf16.msra.mxu0 0
    %102 = vmatprep.subr.bf16.mxu0 0
    %103 = vmatpush1.bf16.msra.mxu0 0
    %104 = vmatprep.subr.bf16.mxu0 0
    %105 = vmatpush1.bf16.msra.mxu0 0
    %106 = vmatprep.subr.bf16.mxu0 0
    %107 = vmatpush1.bf16.msra.mxu0 0
    %108 = vmatprep.subr.bf16.mxu0 0
    %109 = vmatpush1.bf16.msra.mxu0 0
    %110 = vmatprep.mubr.bf16.mxu0 0
    %111 = vmatmul.mubr.bf16.gmra.mrb[0].mxu0 %v76
    %v112 = vpop.f32.mrb[0].mxu0
    %v113 = vadd.f32 %v55, %v112
    %v114 = vpop.f32.mrb[0].mxu0
    %v115 = vpop.f32.mrb[0].mxu0
    %v116 = vadd.f32 %v55, %v115
    %v117 = vpop.f32.mrb[0].mxu0
    %118 = vdwg.mxu0
    %119 = vst [vmem:[#allocation7] sm:$0xff] %v113
    %120 = vst [vmem:[#allocation7 + $0x8] sm:$0xff] %v116
    // Predicated region
    $region22: #{tpu_custom_call.1} parent=1 // pred_check
      _
    $region23: #{tpu_custom_call.1} parent=1 // pred_check_branch
      %122 = sbr.rel (0) target = $region25
    $region24: #{tpu_custom_call.1} parent=1 // pred_region
      %s124 = ssub.s32 256, 256
      %125 = vsyncadd [#allocation4], %s124
      %s126 = sshll.u32 [#allocation7], 4
      %s127 = int_to_ptr.vmem [resolvable:$true] %s126
      %132 = dma.vmem_to_hbm [thread:$0]  %s127, 256, %s3, [#allocation4], 128, 128, 8
    $region25: #{tpu_custom_call.1} parent=1 // pred_fallthru
      _
    // Predicated region
    $region26: #{tpu_custom_call.1} parent=1 // pred_check
      _
    $region27: #{tpu_custom_call.1} parent=1 // pred_check_branch
      %134 = sbr.rel (0) target = $region29
    $region28: #{tpu_custom_call.1} parent=1 // pred_region
      %135 = dma.done [#allocation4], 256
    $region29: #{tpu_custom_call.1} parent=1 // pred_fallthru
      _
    %136 = vsyncpa [#allocation3], 1
    %137 = vsyncpa [#allocation6], 1
    %138 = vsyncpa [#allocation4], 1

</llo_original>
